<compile_context>
chip_gen: v6e
topology: v6e:2x2x1
jax: 0.10.0
libtpu: 0.0.40
codegen_flags: <defaults>
</compile_context>

<pallas_src>
import functools

import jax
import jax.numpy as jnp
from jax.experimental import pallas as pl
from jax.experimental.pallas import tpu as pltpu

LANE = 128      # vreg lane width (last dim)
SUBLANE = 8     # vreg sublane height (second-to-last dim, f32)


def _round_up(n, m):
    return ((n + m - 1) // m) * m


# ----------------------------------------------------------------------------
# Fused Pallas kernel: whole MLP on one row tile.
#   refs = (w0, b0, w1, b1, ..., w_{L-1}, b_{L-1}, o_ref)
# ----------------------------------------------------------------------------
def _fused_mlp_kernel(x_ref, *refs, num_layers):
    o_ref = refs[-1]
    h = x_ref[...]                                   # (tm, C_in), stream dtype
    for i in range(num_layers):
        w = refs[2 * i][...]                         # VMEM-resident (param dtype)
        b = refs[2 * i + 1][...]                     # (1, C_i) f32
        # MXU matmul in the parameter dtype, f32 accumulation, f32 epilogue.
        h = jnp.dot(h.astype(w.dtype), w, preferred_element_type=jnp.float32)
        h = h + b
        if i < num_layers - 1:                       # hidden: (folded) BN + ReLU
            h = jnp.maximum(h, 0.0)
    o_ref[...] = h.astype(o_ref.dtype)


def fused_mlp(x, weights, biases, *, tm):
    """x: (N, C_in) unpadded; weights[i]: (Kp_i, Cp_i); biases[i]: (1, Cp_i) f32."""
    N, K = x.shape
    num_layers = len(weights)
    assert K == weights[0].shape[0]
    c_out = weights[-1].shape[1]
    out_dtype = x.dtype

    grid = (pl.cdiv(N, tm),)                         # partial tail tile is masked

    in_specs = [pl.BlockSpec((tm, K), lambda i: (i, 0))]       # row-tiled activations
    params = []
    for w, b in zip(weights, biases):
        kw, cw = w.shape
        in_specs.append(pl.BlockSpec((kw, cw), lambda i: (0, 0)))   # resident weight
        in_specs.append(pl.BlockSpec((1, cw), lambda i: (0, 0)))    # resident bias
        params.extend([w, b])

    # Advisory cost estimate so XLA schedules producers/consumers around the call.
    flops = 2 * N * sum(int(w.shape[0]) * int(w.shape[1]) for w in weights)
    param_bytes = (sum(int(w.size) * w.dtype.itemsize for w in weights)
                   + sum(int(b.size) * b.dtype.itemsize for b in biases))
    bytes_accessed = (int(x.size) * x.dtype.itemsize
                      + N * c_out * jnp.dtype(out_dtype).itemsize
                      + param_bytes)
    cost = pl.CostEstimate(flops=flops, transcendentals=0,
                           bytes_accessed=bytes_accessed)

    # VMEM budget: constant-index weight/bias blocks are still double-buffered by
    # the pipeline; raise the scoped limit only when the wide-hidden case needs it
    # (cap at 64 MiB so the value stays valid on v7x as well).
    widest = max(K, max(int(w.shape[1]) for w in weights))
    act_bytes = (2 * tm * K * x.dtype.itemsize
                 + 2 * tm * c_out * jnp.dtype(out_dtype).itemsize
                 + 3 * tm * widest * 4)
    vmem_need = 2 * param_bytes + act_bytes
    compiler_kwargs = dict(dimension_semantics=("parallel",))
    if vmem_need > (32 << 20):
        compiler_kwargs["vmem_limit_bytes"] = min(int(vmem_need * 5 // 4), 64 << 20)

    return pl.pallas_call(
        functools.partial(_fused_mlp_kernel, num_layers=num_layers),
        out_shape=jax.ShapeDtypeStruct((N, c_out), out_dtype),
        grid=grid,
        in_specs=in_specs,
        out_specs=pl.BlockSpec((tm, c_out), lambda i: (i, 0)),
        compiler_params=pltpu.CompilerParams(**compiler_kwargs),
        cost_estimate=cost,
    )(x, *params)


# ----------------------------------------------------------------------------
# MLP wrapper: parameter setup (BN folding + internal padding) and reshapes.
# ----------------------------------------------------------------------------
class MLPPallas:
    def __init__(self, key, in_features, hidden_features, out_features,
                 eps=1e-5, param_dtype=jnp.float32):
        dims = [in_features] + list(hidden_features) + [out_features]
        self.in_features = in_features
        self.out_features = out_features
        self.num_layers = len(dims) - 1
        self.param_dtype = param_dtype

        # Kernel-internal (VMEM-only) widths: input/output stay unpadded (they are
        # streamed from/to HBM); hidden widths are padded to 128 (256 once >=256,
        # matching the 2x256^2 MXUs on v6e/v7x).
        def _pad_hidden(c):
            return _round_up(c, 256 if c >= 256 else LANE)

        padded = [in_features]
        for i in range(self.num_layers):
            if i == self.num_layers - 1:
                padded.append(out_features)
            else:
                padded.append(_pad_hidden(dims[i + 1]))

        # Folded + padded parameters fed to the fused kernel.
        self.kernel_weights = []   # (Kp_i, Cp_i), param_dtype
        self.kernel_biases = []    # (1, Cp_i), f32
        # Unfolded f32 parameters kept only for the pure-JAX reference check.
        self.ref_w, self.ref_b, self.ref_scale, self.ref_shift = [], [], [], []

        for i in range(self.num_layers):
            k_in, k_out = dims[i], dims[i + 1]
            key, kw, kb, kg, kbt, km, kv = jax.random.split(key, 7)
            bound = 1.0 / (k_in ** 0.5)
            w = jax.random.uniform(kw, (k_in, k_out), jnp.float32, -bound, bound)
            b = jax.random.uniform(kb, (1, k_out), jnp.float32, -bound, bound)

            if i < self.num_layers - 1:  # hidden layers: eval-mode BN (running stats)
                gamma = jax.random.uniform(kg, (1, k_out), jnp.float32, 0.5, 1.5)
                beta = 0.1 * jax.random.normal(kbt, (1, k_out), jnp.float32)
                rmean = 0.1 * jax.random.normal(km, (1, k_out), jnp.float32)
                rvar = jax.random.uniform(kv, (1, k_out), jnp.float32, 0.5, 1.5)
                scale = gamma / jnp.sqrt(rvar + eps)
                shift = beta - rmean * scale
            else:                        # final Linear: identity "BN"
                scale = jnp.ones((1, k_out), jnp.float32)
                shift = jnp.zeros((1, k_out), jnp.float32)

            self.ref_w.append(w)
            self.ref_b.append(b)
            self.ref_scale.append(scale)
            self.ref_shift.append(shift)

            # Fold BN:  (x@W + b)*scale + shift == x@(W*scale) + (b*scale + shift)
            w_f = w * scale
            b_f = b * scale + shift

            # Pad to the kernel-internal widths. Padded rows/cols and bias entries
            # are zero, so padded hidden channels stay exactly 0 through ReLU and
            # subsequent layers; the streamed output is unpadded by construction.
            kp, cp = padded[i], padded[i + 1]
            wp = jnp.zeros((kp, cp), jnp.float32).at[:k_in, :k_out].set(w_f)
            bp = jnp.zeros((1, cp), jnp.float32).at[:, :k_out].set(b_f)
            self.kernel_weights.append(wp.astype(param_dtype))
            self.kernel_biases.append(bp)                      # keep bias add in f32

    def __call__(self, x, tm=1024):
        x_shape = x.shape
        h = x.reshape(-1, x_shape[-1])        # (N, C_in), no padding, no copy
        n_rows = h.shape[0]

        # Row-tile choice: big tiles (~1024) when rows allow (~85% of HBM roofline
        # vs ~63% at 256); shrink so the "parallel" row axis still has >=2 grid
        # steps when possible, keeping both v7x TensorCores busy.
        sub = max(SUBLANE, 32 // jnp.dtype(h.dtype).itemsize)   # 8 f32, 16 bf16
        tm_eff = min(tm, _round_up(max(n_rows, 1), sub))
        if pl.cdiv(n_rows, tm_eff) < 2 and n_rows >= 2 * sub:
            tm_eff = _round_up(pl.cdiv(n_rows, 2), sub)

        out = fused_mlp(h, self.kernel_weights, self.kernel_biases, tm=tm_eff)
        return out.reshape(*x_shape[:-1], self.out_features)

    # pure-JAX reference (unfolded f32 params) for correctness check
    def reference(self, x):
        x_shape = x.shape
        h = x.reshape(-1, x_shape[-1]).astype(jnp.float32)
        for i in range(self.num_layers):
            h = h @ self.ref_w[i] + self.ref_b[i]
            h = h * self.ref_scale[i] + self.ref_shift[i]
            if i < self.num_layers - 1:
                h = jnp.maximum(h, 0.0)
        return h.reshape(*x_shape[:-1], self.out_features)


# ----------------------------------------------------------------------------
if __name__ == "__main__":
    key = jax.random.PRNGKey(0)
    key, k_params, k_x = jax.random.split(key, 3)

    in_features = 8
    hidden_features = [32, 32]
    out_features = 16

    # x: (*, C_in) — e.g. (batch=2, points=16, C_in=8)
    x = jax.random.normal(k_x, (2, 16, in_features), jnp.float32)

    # f32 path: tight check against the unfolded pure-JAX reference.
    mlp = MLPPallas(k_params, in_features, hidden_features, out_features,
                    param_dtype=jnp.float32)
    out = jax.block_until_ready(mlp(x))
    ref = mlp.reference(x)
    assert out.shape == (2, 16, out_features), out.shape
    assert jnp.allclose(out, ref, atol=1e-4, rtol=1e-4), "f32 mismatch vs reference"

    # bf16 path (halved HBM streams + bf16 MXU rate); looser tolerance for bf16.
    mlp_bf16 = MLPPallas(k_params, in_features, hidden_features, out_features,
                         param_dtype=jnp.bfloat16)
    out_bf16 = jax.block_until_ready(mlp_bf16(x.astype(jnp.bfloat16)))
    assert out_bf16.shape == (2, 16, out_features), out_bf16.shape
    max_err = jnp.max(jnp.abs(out_bf16.astype(jnp.float32) - ref))
    assert max_err < 1e-1, f"bf16 mismatch vs reference: max abs err {max_err}"

    print("KERNEL_OK")
</pallas_src>

<mosaic_0001>
module attributes {stable_mosaic.version = 11 : i64} {
  func.func @_fused_mlp_kernel(%arg0: i32, %arg1: memref<16x8xf32, #tpu.memory_space<vmem>>, %arg2: memref<8x128xf32, #tpu.memory_space<vmem>>, %arg3: memref<1x128xf32, #tpu.memory_space<vmem>>, %arg4: memref<128x128xf32, #tpu.memory_space<vmem>>, %arg5: memref<1x128xf32, #tpu.memory_space<vmem>>, %arg6: memref<128x16xf32, #tpu.memory_space<vmem>>, %arg7: memref<1x16xf32, #tpu.memory_space<vmem>>, %arg8: memref<16x16xf32, #tpu.memory_space<vmem>>) attributes {dimension_semantics = [#tpu.dimension_semantics<parallel>], iteration_bounds = array<i64: 2>, scalar_prefetch = 0 : i64, scratch_operands = 0 : i64, tpu.core_type = #tpu.core_type<tc>, window_params = [{transform_indices = @transform_0, window_bounds = array<i64: 16, 8>}, {pipeline_mode = #tpu.pipeline_mode<synchronous>, transform_indices = @transform_1, window_bounds = array<i64: 8, 128>}, {pipeline_mode = #tpu.pipeline_mode<synchronous>, transform_indices = @transform_2, window_bounds = array<i64: 1, 128>}, {pipeline_mode = #tpu.pipeline_mode<synchronous>, transform_indices = @transform_3, window_bounds = array<i64: 128, 128>}, {pipeline_mode = #tpu.pipeline_mode<synchronous>, transform_indices = @transform_4, window_bounds = array<i64: 1, 128>}, {pipeline_mode = #tpu.pipeline_mode<synchronous>, transform_indices = @transform_5, window_bounds = array<i64: 128, 16>}, {pipeline_mode = #tpu.pipeline_mode<synchronous>, transform_indices = @transform_6, window_bounds = array<i64: 1, 16>}, {transform_indices = @transform_7, window_bounds = array<i64: 16, 16>}]} {
    %c0 = arith.constant 0 : index
    %c0_0 = arith.constant 0 : index
    %0 = vector.load %arg1[%c0, %c0_0] : memref<16x8xf32, #tpu.memory_space<vmem>>, vector<16x8xf32>
    %c0_1 = arith.constant 0 : index
    %c0_2 = arith.constant 0 : index
    %1 = vector.load %arg2[%c0_1, %c0_2] : memref<8x128xf32, #tpu.memory_space<vmem>>, vector<8x128xf32>
    %c0_3 = arith.constant 0 : index
    %c0_4 = arith.constant 0 : index
    %2 = vector.load %arg3[%c0_3, %c0_4] : memref<1x128xf32, #tpu.memory_space<vmem>>, vector<1x128xf32>
    %cst = arith.constant dense<0.000000e+00> : vector<16x128xf32>
    %3 = tpu.matmul %0, %1, %cst {dimension_numbers = #tpu.dot_dimension_numbers<[1], [0], [0], [1], [0, 0, 1, 1], [], []>} : vector<16x8xf32>, vector<8x128xf32>, vector<16x128xf32> -> vector<16x128xf32>
    %4 = vector.broadcast %2 : vector<1x128xf32> to vector<16x128xf32>
    %5 = arith.addf %3, %4 : vector<16x128xf32>
    %cst_5 = arith.constant 0.000000e+00 : f32
    %6 = vector.broadcast %cst_5 : f32 to vector<16x128xf32>
    %7 = arith.maximumf %5, %6 : vector<16x128xf32>
    %c0_6 = arith.constant 0 : index
    %c0_7 = arith.constant 0 : index
    %8 = vector.load %arg4[%c0_6, %c0_7] : memref<128x128xf32, #tpu.memory_space<vmem>>, vector<128x128xf32>
    %c0_8 = arith.constant 0 : index
    %c0_9 = arith.constant 0 : index
    %9 = vector.load %arg5[%c0_8, %c0_9] : memref<1x128xf32, #tpu.memory_space<vmem>>, vector<1x128xf32>
    %cst_10 = arith.constant dense<0.000000e+00> : vector<16x128xf32>
    %10 = tpu.matmul %7, %8, %cst_10 {dimension_numbers = #tpu.dot_dimension_numbers<[1], [0], [0], [1], [0, 0, 1, 1], [], []>} : vector<16x128xf32>, vector<128x128xf32>, vector<16x128xf32> -> vector<16x128xf32>
    %11 = vector.broadcast %9 : vector<1x128xf32> to vector<16x128xf32>
    %12 = arith.addf %10, %11 : vector<16x128xf32>
    %cst_11 = arith.constant 0.000000e+00 : f32
    %13 = vector.broadcast %cst_11 : f32 to vector<16x128xf32>
    %14 = arith.maximumf %12, %13 : vector<16x128xf32>
    %c0_12 = arith.constant 0 : index
    %c0_13 = arith.constant 0 : index
    %15 = vector.load %arg6[%c0_12, %c0_13] : memref<128x16xf32, #tpu.memory_space<vmem>>, vector<128x16xf32>
    %c0_14 = arith.constant 0 : index
    %c0_15 = arith.constant 0 : index
    %16 = vector.load %arg7[%c0_14, %c0_15] : memref<1x16xf32, #tpu.memory_space<vmem>>, vector<1x16xf32>
    %cst_16 = arith.constant dense<0.000000e+00> : vector<16x16xf32>
    %17 = tpu.matmul %14, %15, %cst_16 {dimension_numbers = #tpu.dot_dimension_numbers<[1], [0], [0], [1], [0, 0, 1, 1], [], []>} : vector<16x128xf32>, vector<128x16xf32>, vector<16x16xf32> -> vector<16x16xf32>
    %18 = vector.broadcast %16 : vector<1x16xf32> to vector<16x16xf32>
    %19 = arith.addf %17, %18 : vector<16x16xf32>
    %c0_17 = arith.constant 0 : index
    %c0_18 = arith.constant 0 : index
    %20 = vector.load %arg8[%c0_17, %c0_18] : memref<16x16xf32, #tpu.memory_space<vmem>>, vector<16x16xf32>
    tpu.vector_store %arg8[%c0_17, %c0_18], %19 {strides = array<i32>} : memref<16x16xf32, #tpu.memory_space<vmem>>, vector<16x16xf32>,
    return
  }
  func.func @transform_0(%arg0: i32) -> (i32, i32) {
    %c0_i32 = arith.constant 0 : i32
    %c0_i32_0 = arith.constant 0 : i32
    return %arg0, %c0_i32 : i32, i32
  }
  func.func @transform_1(%arg0: i32) -> (i32, i32) {
    %c0_i32 = arith.constant 0 : i32
    %c0_i32_0 = arith.constant 0 : i32
    %c0_i32_1 = arith.constant 0 : i32
    return %c0_i32, %c0_i32_0 : i32, i32
  }
  func.func @transform_2(%arg0: i32) -> (i32, i32) {
    %c0_i32 = arith.constant 0 : i32
    %c0_i32_0 = arith.constant 0 : i32
    %c0_i32_1 = arith.constant 0 : i32
    return %c0_i32, %c0_i32_0 : i32, i32
  }
  func.func @transform_3(%arg0: i32) -> (i32, i32) {
    %c0_i32 = arith.constant 0 : i32
    %c0_i32_0 = arith.constant 0 : i32
    %c0_i32_1 = arith.constant 0 : i32
    return %c0_i32, %c0_i32_0 : i32, i32
  }
  func.func @transform_4(%arg0: i32) -> (i32, i32) {
    %c0_i32 = arith.constant 0 : i32
    %c0_i32_0 = arith.constant 0 : i32
    %c0_i32_1 = arith.constant 0 : i32
    return %c0_i32, %c0_i32_0 : i32, i32
  }
  func.func @transform_5(%arg0: i32) -> (i32, i32) {
    %c0_i32 = arith.constant 0 : i32
    %c0_i32_0 = arith.constant 0 : i32
    %c0_i32_1 = arith.constant 0 : i32
    return %c0_i32, %c0_i32_0 : i32, i32
  }
  func.func @transform_6(%arg0: i32) -> (i32, i32) {
    %c0_i32 = arith.constant 0 : i32
    %c0_i32_0 = arith.constant 0 : i32
    %c0_i32_1 = arith.constant 0 : i32
    return %c0_i32, %c0_i32_0 : i32, i32
  }
  func.func @transform_7(%arg0: i32) -> (i32, i32) {
    %c0_i32 = arith.constant 0 : i32
    %c0_i32_0 = arith.constant 0 : i32
    return %arg0, %c0_i32 : i32, i32
  }
}

</mosaic_0001>

<llo_original>
// kernel: tpu_custom_call.1
$region0: #{tpu_custom_call.1}
  #allocation0 [shape = 'u32[]', space=smem, size = 0x4, offset = 0x4, fixed_abs, tag = 'smem constant byte address 0x4 - core index']
  #allocation1 [shape = 'u32[144,128]{1,0:T(1,128)}', space=vmem, size = 0x12000, scoped, tag = 'internal scratch']
  %s0 = inlined_call_operand.vmem [shape: f32[32,8], index: 0, kind: input, shape index: {}]
  %s1 = inlined_call_operand.vmem [shape: f32[8,128], index: 1, kind: input, shape index: {}]
  %s2 = inlined_call_operand.vmem [shape: f32[1,128], index: 2, kind: input, shape index: {}]
  %s3 = inlined_call_operand.vmem [shape: f32[128,128], index: 3, kind: input, shape index: {}]
  %s4 = inlined_call_operand.vmem [shape: f32[1,128], index: 4, kind: input, shape index: {}]
  %s5 = inlined_call_operand.vmem [shape: f32[128,16], index: 5, kind: input, shape index: {}]
  %s6 = inlined_call_operand.vmem [shape: f32[1,16], index: 6, kind: input, shape index: {}]
  %s7 = inlined_call_operand.vmem [shape: f32[32,16], index: 7, kind: output, shape index: {}]
  %s8 = sld [smem:[#allocation0]]
  $region61: #{tpu_custom_call.1} parent=0
    _
  %s10 = ssub.s32 1, %s8
  %s11 = scalar_select 0, %s10, %s8
  loop: start=0, step=1, limit=4
  $region2: #{tpu_custom_call.1} parent=0 // loop_pre_header
    _
  $region3: #{tpu_custom_call.1} parent=0 // loop_header
    %s13 = sphi 0, %s17
    %p14 = scmp.ge.s32.totalorder %s13, 4
    %s23 = sphi 0, %s25
    %s26 = sphi 0, %s23
    %s27 = sphi 0, %s26
    %s43 = sphi 0, %s27
    %s47 = sphi 0, %s47
    %s49 = sphi 0, %s47
    %s50 = sphi 0, %s49
    %s64 = sphi 0, %s50
    %s68 = sphi 0, %s68
    %s70 = sphi 0, %s68
    %s71 = sphi 0, %s70
    %s85 = sphi 0, %s71
    %s89 = sphi 0, %s89
    %s91 = sphi 0, %s89
    %s92 = sphi 0, %s91
    %s106 = sphi 0, %s92
    %s110 = sphi 0, %s110
    %s112 = sphi 0, %s110
    %s113 = sphi 0, %s112
    %s127 = sphi 0, %s113
    %s131 = sphi 0, %s131
    %s133 = sphi 0, %s131
    %s134 = sphi 0, %s133
    %s148 = sphi 0, %s134
    %s152 = sphi 0, %s152
    %s154 = sphi 0, %s152
    %s155 = sphi 0, %s154
    %s169 = sphi 0, %s155
    %s175 = sphi 0, %s177
    %s178 = sphi 0, %s175
    %s179 = sphi 0, %s178
    %s195 = sphi 0, %s179
  $region4: #{tpu_custom_call.1} parent=0 // loop_header_branch
    %16 = sbr.rel (%p14) target = $region8
  $region5: #{tpu_custom_call.1} parent=0 // loop_body
    %s18 = ssub.s32 %s13, 1
    %s19 = ssub.s32 %s13, 2
    %s20 = sadd.s32 %s13, 1
    %s21 = ssub.s32 %s13, %s20
    %p22 = scmp.eq.s32.totalorder %s21, 0
    %s24 = sadd.s32 %s23, 1
    %s25 = scalar_select %p22, %s23, %s24
    %p28 = pneg %p22
    %p29 = scmp.eq.s32.totalorder %s13, 1
    %p30 = por %p28, %p29
    %p31 = scmp.ne.s32.totalorder %s23, %s26
    %p32 = scmp.eq.s32.totalorder %s13, 0
    %p33 = por %p31, %p32
    %p34 = scmp.ne.s32.totalorder %s23, %s26
    %p35 = scmp.eq.s32.totalorder %s18, 1
    %p36 = por %p34, %p35
    %p37 = scmp.ne.s32.totalorder %s26, %s27
    %p38 = scmp.eq.s32.totalorder %s18, 0
    %p39 = por %p37, %p38
    %p40 = scmp.ne.s32.totalorder %s26, %s27
    %p41 = scmp.eq.s32.totalorder %s19, 1
    %p42 = por %p40, %p41
    %p44 = scmp.ne.s32.totalorder %s27, %s43
    %p45 = scmp.eq.s32.totalorder %s19, 0
    %p46 = por %p44, %p45
    %s48 = sadd.s32 %s47, 1
    %p51 = scmp.eq.s32.totalorder %s13, 1
    %p52 = scmp.ne.s32.totalorder %s47, %s49
    %p53 = scmp.eq.s32.totalorder %s13, 0
    %p54 = por %p52, %p53
    %p55 = scmp.ne.s32.totalorder %s47, %s49
    %p56 = scmp.eq.s32.totalorder %s18, 1
    %p57 = por %p55, %p56
    %p58 = scmp.ne.s32.totalorder %s49, %s50
    %p59 = scmp.eq.s32.totalorder %s18, 0
    %p60 = por %p58, %p59
    %p61 = scmp.ne.s32.totalorder %s49, %s50
    %p62 = scmp.eq.s32.totalorder %s19, 1
    %p63 = por %p61, %p62
    %p65 = scmp.ne.s32.totalorder %s50, %s64
    %p66 = scmp.eq.s32.totalorder %s19, 0
    %p67 = por %p65, %p66
    %s69 = sadd.s32 %s68, 1
    %p72 = scmp.eq.s32.totalorder %s13, 1
    %p73 = scmp.ne.s32.totalorder %s68, %s70
    %p74 = scmp.eq.s32.totalorder %s13, 0
    %p75 = por %p73, %p74
    %p76 = scmp.ne.s32.totalorder %s68, %s70
    %p77 = scmp.eq.s32.totalorder %s18, 1
    %p78 = por %p76, %p77
    %p79 = scmp.ne.s32.totalorder %s70, %s71
    %p80 = scmp.eq.s32.totalorder %s18, 0
    %p81 = por %p79, %p80
    %p82 = scmp.ne.s32.totalorder %s70, %s71
    %p83 = scmp.eq.s32.totalorder %s19, 1
    %p84 = por %p82, %p83
    %p86 = scmp.ne.s32.totalorder %s71, %s85
    %p87 = scmp.eq.s32.totalorder %s19, 0
    %p88 = por %p86, %p87
    %s90 = sadd.s32 %s89, 1
    %p93 = scmp.eq.s32.totalorder %s13, 1
    %p94 = scmp.ne.s32.totalorder %s89, %s91
    %p95 = scmp.eq.s32.totalorder %s13, 0
    %p96 = por %p94, %p95
    %p97 = scmp.ne.s32.totalorder %s89, %s91
    %p98 = scmp.eq.s32.totalorder %s18, 1
    %p99 = por %p97, %p98
    %p100 = scmp.ne.s32.totalorder %s91, %s92
    %p101 = scmp.eq.s32.totalorder %s18, 0
    %p102 = por %p100, %p101
    %p103 = scmp.ne.s32.totalorder %s91, %s92
    %p104 = scmp.eq.s32.totalorder %s19, 1
    %p105 = por %p103, %p104
    %p107 = scmp.ne.s32.totalorder %s92, %s106
    %p108 = scmp.eq.s32.totalorder %s19, 0
    %p109 = por %p107, %p108
    %s111 = sadd.s32 %s110, 1
    %p114 = scmp.eq.s32.totalorder %s13, 1
    %p115 = scmp.ne.s32.totalorder %s110, %s112
    %p116 = scmp.eq.s32.totalorder %s13, 0
    %p117 = por %p115, %p116
    %p118 = scmp.ne.s32.totalorder %s110, %s112
    %p119 = scmp.eq.s32.totalorder %s18, 1
    %p120 = por %p118, %p119
    %p121 = scmp.ne.s32.totalorder %s112, %s113
    %p122 = scmp.eq.s32.totalorder %s18, 0
    %p123 = por %p121, %p122
    %p124 = scmp.ne.s32.totalorder %s112, %s113
    %p125 = scmp.eq.s32.totalorder %s19, 1
    %p126 = por %p124, %p125
    %p128 = scmp.ne.s32.totalorder %s113, %s127
    %p129 = scmp.eq.s32.totalorder %s19, 0
    %p130 = por %p128, %p129
    %s132 = sadd.s32 %s131, 1
    %p135 = scmp.eq.s32.totalorder %s13, 1
    %p136 = scmp.ne.s32.totalorder %s131, %s133
    %p137 = scmp.eq.s32.totalorder %s13, 0
    %p138 = por %p136, %p137
    %p139 = scmp.ne.s32.totalorder %s131, %s133
    %p140 = scmp.eq.s32.totalorder %s18, 1
    %p141 = por %p139, %p140
    %p142 = scmp.ne.s32.totalorder %s133, %s134
    %p143 = scmp.eq.s32.totalorder %s18, 0
    %p144 = por %p142, %p143
    %p145 = scmp.ne.s32.totalorder %s133, %s134
    %p146 = scmp.eq.s32.totalorder %s19, 1
    %p147 = por %p145, %p146
    %p149 = scmp.ne.s32.totalorder %s134, %s148
    %p150 = scmp.eq.s32.totalorder %s19, 0
    %p151 = por %p149, %p150
    %s153 = sadd.s32 %s152, 1
    %p156 = scmp.eq.s32.totalorder %s13, 1
    %p157 = scmp.ne.s32.totalorder %s152, %s154
    %p158 = scmp.eq.s32.totalorder %s13, 0
    %p159 = por %p157, %p158
    %p160 = scmp.ne.s32.totalorder %s152, %s154
    %p161 = scmp.eq.s32.totalorder %s18, 1
    %p162 = por %p160, %p161
    %p163 = scmp.ne.s32.totalorder %s154, %s155
    %p164 = scmp.eq.s32.totalorder %s18, 0
    %p165 = por %p163, %p164
    %p166 = scmp.ne.s32.totalorder %s154, %s155
    %p167 = scmp.eq.s32.totalorder %s19, 1
    %p168 = por %p166, %p167
    %p170 = scmp.ne.s32.totalorder %s155, %s169
    %p171 = scmp.eq.s32.totalorder %s19, 0
    %p172 = por %p170, %p171
    %s173 = ssub.s32 %s13, %s20
    %p174 = scmp.eq.s32.totalorder %s173, 0
    %s176 = sadd.s32 %s175, 1
    %s177 = scalar_select %p174, %s175, %s176
    %p180 = pneg %p174
    %p181 = scmp.eq.s32.totalorder %s13, 1
    %p182 = por %p180, %p181
    %p183 = scmp.ne.s32.totalorder %s175, %s178
    %p184 = scmp.eq.s32.totalorder %s13, 0
    %p185 = por %p183, %p184
    %p186 = scmp.ne.s32.totalorder %s175, %s178
    %p187 = scmp.eq.s32.totalorder %s18, 1
    %p188 = por %p186, %p187
    %p189 = scmp.ne.s32.totalorder %s178, %s179
    %p190 = scmp.eq.s32.totalorder %s18, 0
    %p191 = por %p189, %p190
    %p192 = scmp.ne.s32.totalorder %s178, %s179
    %p193 = scmp.eq.s32.totalorder %s19, 1
    %p194 = por %p192, %p193
    %p196 = scmp.ne.s32.totalorder %s179, %s195
    %p197 = scmp.eq.s32.totalorder %s19, 0
    %p198 = por %p196, %p197
    %p199 = scmp.le.s32.totalorder 1, %s13
    %p200 = scmp.lt.s32.totalorder %s13, 3
    %p201 = pnand %p199, %p200
    %p202 = pneg %p201
    // Predicated region
    $region9: #{tpu_custom_call.1} parent=5 // pred_check
      _
    $region10: #{tpu_custom_call.1} parent=5 // pred_check_branch
      %204 = sbr.rel (%p201) target = $region12
    $region11: #{tpu_custom_call.1} parent=5 // pred_region
      %s205 = ssub.s32 %s13, 1
      // Predicated region
      $region13: #{tpu_custom_call.1} parent=11 // pred_check
        %p206 = pneg %p60
      $region14: #{tpu_custom_call.1} parent=11 // pred_check_branch
        %208 = sbr.rel (%p206) target = $region16
      $region15: #{tpu_custom_call.1} parent=11 // pred_region
        _
      $region16: #{tpu_custom_call.1} parent=11 // pred_fallthru
        _
      // Predicated region
      $region17: #{tpu_custom_call.1} parent=11 // pred_check
        %p209 = pneg %p81
      $region18: #{tpu_custom_call.1} parent=11 // pred_check_branch
        %211 = sbr.rel (%p209) target = $region20
      $region19: #{tpu_custom_call.1} parent=11 // pred_region
        _
      $region20: #{tpu_custom_call.1} parent=11 // pred_fallthru
        _
      // Predicated region
      $region21: #{tpu_custom_call.1} parent=11 // pred_check
        %p212 = pneg %p102
      $region22: #{tpu_custom_call.1} parent=11 // pred_check_branch
        %214 = sbr.rel (%p212) target = $region24
      $region23: #{tpu_custom_call.1} parent=11 // pred_region
        _
      $region24: #{tpu_custom_call.1} parent=11 // pred_fallthru
        _
      // Predicated region
      $region25: #{tpu_custom_call.1} parent=11 // pred_check
        %p215 = pneg %p123
      $region26: #{tpu_custom_call.1} parent=11 // pred_check_branch
        %217 = sbr.rel (%p215) target = $region28
      $region27: #{tpu_custom_call.1} parent=11 // pred_region
        _
      $region28: #{tpu_custom_call.1} parent=11 // pred_fallthru
        _
      // Predicated region
      $region29: #{tpu_custom_call.1} parent=11 // pred_check
        %p218 = pneg %p144
      $region30: #{tpu_custom_call.1} parent=11 // pred_check_branch
        %220 = sbr.rel (%p218) target = $region32
      $region31: #{tpu_custom_call.1} parent=11 // pred_region
        _
      $region32: #{tpu_custom_call.1} parent=11 // pred_fallthru
        _
      // Predicated region
      $region33: #{tpu_custom_call.1} parent=11 // pred_check
        %p221 = pneg %p165
      $region34: #{tpu_custom_call.1} parent=11 // pred_check_branch
        %223 = sbr.rel (%p221) target = $region36
      $region35: #{tpu_custom_call.1} parent=11 // pred_region
        _
      $region36: #{tpu_custom_call.1} parent=11 // pred_fallthru
        _
    $region12: #{tpu_custom_call.1} parent=5 // pred_fallthru
      _
    %p224 = scmp.lt.s32.totalorder %s13, 2
    // Predicated region
    $region37: #{tpu_custom_call.1} parent=5 // pred_check
      %p225 = pneg %p224
    $region38: #{tpu_custom_call.1} parent=5 // pred_check_branch
      %227 = sbr.rel (%p225) target = $region40
    $region39: #{tpu_custom_call.1} parent=5 // pred_region
      // Predicated region
      $region41: #{tpu_custom_call.1} parent=39 // pred_check
        %p228 = pneg %p33
      $region42: #{tpu_custom_call.1} parent=39 // pred_check_branch
        %230 = sbr.rel (%p228) target = $region44
      $region43: #{tpu_custom_call.1} parent=39 // pred_region
        %s231 = smul.u32 2, %s13
        %p232 = scmp.lt.s32.totalorder %s231, 3
        %s233 = scalar_select %p232, %s231, 3
        %s234 = smul.addr %s233, 8
        %s235 = scalar_lea.vmem %s0, %s234
        %s236 = smul.u32 2, %s13
      $region44: #{tpu_custom_call.1} parent=39 // pred_fallthru
        _
    $region40: #{tpu_custom_call.1} parent=5 // pred_fallthru
      _
    %p237 = scmp.le.s32.totalorder 1, %s13
    %p238 = scmp.lt.s32.totalorder %s13, 3
    %p239 = pnand %p237, %p238
    %p240 = pneg %p239
    // Predicated region
    $region45: #{tpu_custom_call.1} parent=5 // pred_check
      _
    $region46: #{tpu_custom_call.1} parent=5 // pred_check_branch
      %242 = sbr.rel (%p239) target = $region48
    $region47: #{tpu_custom_call.1} parent=5 // pred_region
      %s243 = ssub.s32 %s13, 1
      %s244 = smul.u32 2, %s18
      %p245 = scmp.lt.s32.totalorder %s244, 3
      %s246 = scalar_select %p245, %s244, 3
      %s247 = smul.addr %s246, 8
      %s248 = scalar_lea.vmem %s0, %s247
      %p249 = pneg %p39
      %p250 = pneg %p36
      %p251 = pneg %p60
      %p252 = pneg %p57
      %p253 = pneg %p81
      %p254 = pneg %p78
      %p255 = pneg %p102
      %p256 = pneg %p99
      %p257 = pneg %p123
      %p258 = pneg %p120
      %p259 = pneg %p144
      %p260 = pneg %p141
      %p261 = pneg %p165
      %p262 = pneg %p162
      %p263 = pneg %p191
      %p264 = pneg %p188
      %s265 = smul.u32 2, %s18
      %p266 = scmp.lt.s32.totalorder %s265, 3
      %s267 = scalar_select %p266, %s265, 3
      %s268 = smul.addr %s267, 8
      %s269 = scalar_lea.vmem %s7, %s268
      %s270 = smul.u32 2, %s18
      %p271 = scmp.lt.s32.totalorder %s270, 3
      %s272 = scalar_select %p271, %s270, 3
      %s273 = smul.addr %s272, 8
      %s274 = scalar_lea.vmem %s0, %s273
      %s275 = smul.u32 2, %s18
      %s276 = smul.u32 2, %s18
      %p277 = scmp.lt.s32.totalorder %s276, 3
      %s278 = scalar_select %p277, %s276, 3
      %s279 = smul.addr %s278, 8
      %s280 = scalar_lea.vmem %s7, %s279
      %s281 = smul.u32 2, %s18
      %v282 = vld [vmem:[%s274] sm:$0xff]
      %v283 = vld [vmem:[%s274 + $0x8] sm:$0xff]
      %v284 = vld [vmem:[%s1] sm:$0xff]
      %v285 = vld [vmem:[%s2] sm:$0x1]
      %v287 = vlaneseq
      %v288 = vshrl.u32 %v287, 7
      %v289 = vsub.s32 0, %v288
      %v290 = vrot.slane %v285, %v289
      %vm292 = vcmask 64512
      %v294 = vsel %vm292, %v282, 0
      %v297 = vsel %vm292, %v283, 0
      %299 = vmatprep.subr.mxu0 0.0
      %300 = vmatpush1.msra.mxu0 0.0
      %301 = vmatprep.subr.mxu0 0.0
      %302 = vmatpush1.msra.mxu0 0.0
      %303 = vmatprep.subr.mxu0 0.0
      %304 = vmatpush1.msra.mxu0 0.0
      %305 = vmatprep.subr.mxu0 0.0
      %306 = vmatpush1.msra.mxu0 0.0
      %307 = vmatprep.subr.mxu0 0.0
      %308 = vmatpush1.msra.mxu0 0.0
      %309 = vmatprep.subr.mxu0 0.0
      %310 = vmatpush1.msra.mxu0 0.0
      %311 = vmatprep.subr.mxu0 0.0
      %312 = vmatpush1.msra.mxu0 0.0
      %313 = vmatprep.subr.mxu0 0.0
      %314 = vmatpush1.msra.mxu0 0.0
      %315 = vmatprep.subr.mxu0 0.0
      %316 = vmatpush1.msra.mxu0 0.0
      %317 = vmatprep.subr.mxu0 0.0
      %318 = vmatpush1.msra.mxu0 0.0
      %319 = vmatprep.subr.mxu0 0.0
      %320 = vmatpush1.msra.mxu0 0.0
      %321 = vmatprep.subr.mxu0 0.0
      %322 = vmatpush1.msra.mxu0 0.0
      %323 = vmatprep.subr.mxu0 0.0
      %324 = vmatpush1.msra.mxu0 0.0
      %325 = vmatprep.subr.mxu0 0.0
      %326 = vmatpush1.msra.mxu0 0.0
      %327 = vmatprep.subr.mxu0 0.0
      %328 = vmatpush1.msra.mxu0 0.0
      %329 = vmatprep.subr.mxu0 0.0
      %330 = vmatpush1.msra.mxu0 %v284
      %331 = vmatprep.subr.mxu0 0.0
      %332 = vmatpush2.msra.mxu0 0.0
      %333 = vmatprep.subr.mxu0 0.0
      %334 = vmatpush2.msra.mxu0 0.0
      %335 = vmatprep.subr.mxu0 0.0
      %336 = vmatpush2.msra.mxu0 0.0
      %337 = vmatprep.subr.mxu0 0.0
      %338 = vmatpush2.msra.mxu0 0.0
      %339 = vmatprep.subr.mxu0 0.0
      %340 = vmatpush2.msra.mxu0 0.0
      %341 = vmatprep.subr.mxu0 0.0
      %342 = vmatpush2.msra.mxu0 0.0
      %343 = vmatprep.subr.mxu0 0.0
      %344 = vmatpush2.msra.mxu0 0.0
      %345 = vmatprep.subr.mxu0 0.0
      %346 = vmatpush2.msra.mxu0 0.0
      %347 = vmatprep.subr.mxu0 0.0
      %348 = vmatpush2.msra.mxu0 0.0
      %349 = vmatprep.subr.mxu0 0.0
      %350 = vmatpush2.msra.mxu0 0.0
      %351 = vmatprep.subr.mxu0 0.0
      %352 = vmatpush2.msra.mxu0 0.0
      %353 = vmatprep.subr.mxu0 0.0
      %354 = vmatpush2.msra.mxu0 0.0
      %355 = vmatprep.subr.mxu0 0.0
      %356 = vmatpush2.msra.mxu0 0.0
      %357 = vmatprep.subr.mxu0 0.0
      %358 = vmatpush2.msra.mxu0 0.0
      %359 = vmatprep.subr.mxu0 0.0
      %360 = vmatpush2.msra.mxu0 0.0
      %361 = vmatprep.subr.mxu0 0.0
      %362 = vmatpush2.msra.mxu0 0.0
      %363 = vmatprep.mubr.f32.mxu0 0.0
      %364 = vmatmul.mubr.f32.gmra.mxu0 %v294
      %v365 = vpop.f32.mrf.mxu0
      %v366 = vadd.f32 %v290, %v365
      %v367 = vpop.f32.mrf.mxu0
      %368 = vmatprep.mubr.f32.mxu0 0.0
      %369 = vmatmul.mubr.f32.gmra.mxu0 %v297
      %v370 = vpop.f32.mrf.mxu0
      %v371 = vadd.f32 %v290, %v370
      %v372 = vpop.f32.mrf.mxu0
      %373 = vdwg.mxu0
      %v374 = vmax.f32 %v366, 0.0
      %v375 = vmax.f32 %v371, 0.0
      %v376 = vld [vmem:[%s3] sm:$0xff]
      %v377 = vld [vmem:[%s3 + $0x8] sm:$0xff]
      %v378 = vld [vmem:[%s3 + $0x10] sm:$0xff]
      %v379 = vld [vmem:[%s3 + $0x18] sm:$0xff]
      %v380 = vld [vmem:[%s3 + $0x20] sm:$0xff]
      %v381 = vld [vmem:[%s3 + $0x28] sm:$0xff]
      %v382 = vld [vmem:[%s3 + $0x30] sm:$0xff]
      %v383 = vld [vmem:[%s3 + $0x38] sm:$0xff]
      %v384 = vld [vmem:[%s3 + $0x40] sm:$0xff]
      %v385 = vld [vmem:[%s3 + $0x48] sm:$0xff]
      %v386 = vld [vmem:[%s3 + $0x50] sm:$0xff]
      %v387 = vld [vmem:[%s3 + $0x58] sm:$0xff]
      %v388 = vld [vmem:[%s3 + $0x60] sm:$0xff]
      %v389 = vld [vmem:[%s3 + $0x68] sm:$0xff]
      %v390 = vld [vmem:[%s3 + $0x70] sm:$0xff]
      %v391 = vld [vmem:[%s3 + $0x78] sm:$0xff]
      %v392 = vld [vmem:[%s4] sm:$0x1]
      %v394 = vlaneseq
      %v395 = vshrl.u32 %v394, 7
      %v396 = vsub.s32 0, %v395
      %v397 = vrot.slane %v392, %v396
      %399 = vmatprep.subr.mxu0 0.0
      %400 = vmatpush1.msra.mxu0 %v391
      %401 = vmatprep.subr.mxu0 0.0
      %402 = vmatpush1.msra.mxu0 %v390
      %403 = vmatprep.subr.mxu0 0.0
      %404 = vmatpush1.msra.mxu0 %v389
      %405 = vmatprep.subr.mxu0 0.0
      %406 = vmatpush1.msra.mxu0 %v388
      %407 = vmatprep.subr.mxu0 0.0
      %408 = vmatpush1.msra.mxu0 %v387
      %409 = vmatprep.subr.mxu0 0.0
      %410 = vmatpush1.msra.mxu0 %v386
      %411 = vmatprep.subr.mxu0 0.0
      %412 = vmatpush1.msra.mxu0 %v385
      %413 = vmatprep.subr.mxu0 0.0
      %414 = vmatpush1.msra.mxu0 %v384
      %415 = vmatprep.subr.mxu0 0.0
      %416 = vmatpush1.msra.mxu0 %v383
      %417 = vmatprep.subr.mxu0 0.0
      %418 = vmatpush1.msra.mxu0 %v382
      %419 = vmatprep.subr.mxu0 0.0
      %420 = vmatpush1.msra.mxu0 %v381
      %421 = vmatprep.subr.mxu0 0.0
      %422 = vmatpush1.msra.mxu0 %v380
      %423 = vmatprep.subr.mxu0 0.0
      %424 = vmatpush1.msra.mxu0 %v379
      %425 = vmatprep.subr.mxu0 0.0
      %426 = vmatpush1.msra.mxu0 %v378
      %427 = vmatprep.subr.mxu0 0.0
      %428 = vmatpush1.msra.mxu0 %v377
      %429 = vmatprep.subr.mxu0 0.0
      %430 = vmatpush1.msra.mxu0 %v376
      %431 = vmatprep.subr.mxu0 0.0
      %432 = vmatpush2.msra.mxu0 0.0
      %433 = vmatprep.subr.mxu0 0.0
      %434 = vmatpush2.msra.mxu0 0.0
      %435 = vmatprep.subr.mxu0 0.0
      %436 = vmatpush2.msra.mxu0 0.0
      %437 = vmatprep.subr.mxu0 0.0
      %438 = vmatpush2.msra.mxu0 0.0
      %439 = vmatprep.subr.mxu0 0.0
      %440 = vmatpush2.msra.mxu0 0.0
      %441 = vmatprep.subr.mxu0 0.0
      %442 = vmatpush2.msra.mxu0 0.0
      %443 = vmatprep.subr.mxu0 0.0
      %444 = vmatpush2.msra.mxu0 0.0
      %445 = vmatprep.subr.mxu0 0.0
      %446 = vmatpush2.msra.mxu0 0.0
      %447 = vmatprep.subr.mxu0 0.0
      %448 = vmatpush2.msra.mxu0 0.0
      %449 = vmatprep.subr.mxu0 0.0
      %450 = vmatpush2.msra.mxu0 0.0
      %451 = vmatprep.subr.mxu0 0.0
      %452 = vmatpush2.msra.mxu0 0.0
      %453 = vmatprep.subr.mxu0 0.0
      %454 = vmatpush2.msra.mxu0 0.0
      %455 = vmatprep.subr.mxu0 0.0
      %456 = vmatpush2.msra.mxu0 0.0
      %457 = vmatprep.subr.mxu0 0.0
      %458 = vmatpush2.msra.mxu0 0.0
      %459 = vmatprep.subr.mxu0 0.0
      %460 = vmatpush2.msra.mxu0 0.0
      %461 = vmatprep.subr.mxu0 0.0
      %462 = vmatpush2.msra.mxu0 0.0
      %463 = vmatprep.mubr.f32.mxu0 0.0
      %464 = vmatmul.mubr.f32.gmra.mxu0 %v374
      %v465 = vpop.f32.mrf.mxu0
      %v466 = vadd.f32 %v397, %v465
      %v467 = vpop.f32.mrf.mxu0
      %468 = vmatprep.mubr.f32.mxu0 0.0
      %469 = vmatmul.mubr.f32.gmra.mxu0 %v375
      %v470 = vpop.f32.mrf.mxu0
      %v471 = vadd.f32 %v397, %v470
      %v472 = vpop.f32.mrf.mxu0
      %473 = vdwg.mxu0
      %v474 = vmax.f32 %v466, 0.0
      %v475 = vmax.f32 %v471, 0.0
      %v476 = vld [vmem:[%s5] sm:$0xff]
      %v477 = vld [vmem:[%s5 + $0x8] sm:$0xff]
      %v478 = vld [vmem:[%s5 + $0x10] sm:$0xff]
      %v479 = vld [vmem:[%s5 + $0x18] sm:$0xff]
      %v480 = vld [vmem:[%s5 + $0x20] sm:$0xff]
      %v481 = vld [vmem:[%s5 + $0x28] sm:$0xff]
      %v482 = vld [vmem:[%s5 + $0x30] sm:$0xff]
      %v483 = vld [vmem:[%s5 + $0x38] sm:$0xff]
      %v484 = vld [vmem:[%s5 + $0x40] sm:$0xff]
      %v485 = vld [vmem:[%s5 + $0x48] sm:$0xff]
      %v486 = vld [vmem:[%s5 + $0x50] sm:$0xff]
      %v487 = vld [vmem:[%s5 + $0x58] sm:$0xff]
      %v488 = vld [vmem:[%s5 + $0x60] sm:$0xff]
      %v489 = vld [vmem:[%s5 + $0x68] sm:$0xff]
      %v490 = vld [vmem:[%s5 + $0x70] sm:$0xff]
      %v491 = vld [vmem:[%s5 + $0x78] sm:$0xff]
      %v492 = vld [vmem:[%s6] sm:$0x1]
      %v494 = vlaneseq
      %v495 = vshrl.u32 %v494, 7
      %v496 = vsub.s32 0, %v495
      %v497 = vrot.slane %v492, %v496
      %499 = vmatprep.subr.mxu0 0.0
      %500 = vmatpush1.msra.mxu0 %v491
      %501 = vmatprep.subr.mxu0 0.0
      %502 = vmatpush1.msra.mxu0 %v490
      %503 = vmatprep.subr.mxu0 0.0
      %504 = vmatpush1.msra.mxu0 %v489
      %505 = vmatprep.subr.mxu0 0.0
      %506 = vmatpush1.msra.mxu0 %v488
      %507 = vmatprep.subr.mxu0 0.0
      %508 = vmatpush1.msra.mxu0 %v487
      %509 = vmatprep.subr.mxu0 0.0
      %510 = vmatpush1.msra.mxu0 %v486
      %511 = vmatprep.subr.mxu0 0.0
      %512 = vmatpush1.msra.mxu0 %v485
      %513 = vmatprep.subr.mxu0 0.0
      %514 = vmatpush1.msra.mxu0 %v484
      %515 = vmatprep.subr.mxu0 0.0
      %516 = vmatpush1.msra.mxu0 %v483
      %517 = vmatprep.subr.mxu0 0.0
      %518 = vmatpush1.msra.mxu0 %v482
      %519 = vmatprep.subr.mxu0 0.0
      %520 = vmatpush1.msra.mxu0 %v481
      %521 = vmatprep.subr.mxu0 0.0
      %522 = vmatpush1.msra.mxu0 %v480
      %523 = vmatprep.subr.mxu0 0.0
      %524 = vmatpush1.msra.mxu0 %v479
      %525 = vmatprep.subr.mxu0 0.0
      %526 = vmatpush1.msra.mxu0 %v478
      %527 = vmatprep.subr.mxu0 0.0
      %528 = vmatpush1.msra.mxu0 %v477
      %529 = vmatprep.subr.mxu0 0.0
      %530 = vmatpush1.msra.mxu0 %v476
      %531 = vmatprep.subr.mxu0 0.0
      %532 = vmatpush2.msra.mxu0 0.0
      %533 = vmatprep.subr.mxu0 0.0
      %534 = vmatpush2.msra.mxu0 0.0
      %535 = vmatprep.subr.mxu0 0.0
      %536 = vmatpush2.msra.mxu0 0.0
      %537 = vmatprep.subr.mxu0 0.0
      %538 = vmatpush2.msra.mxu0 0.0
      %539 = vmatprep.subr.mxu0 0.0
      %540 = vmatpush2.msra.mxu0 0.0
      %541 = vmatprep.subr.mxu0 0.0
      %542 = vmatpush2.msra.mxu0 0.0
      %543 = vmatprep.subr.mxu0 0.0
      %544 = vmatpush2.msra.mxu0 0.0
      %545 = vmatprep.subr.mxu0 0.0
      %546 = vmatpush2.msra.mxu0 0.0
      %547 = vmatprep.subr.mxu0 0.0
      %548 = vmatpush2.msra.mxu0 0.0
      %549 = vmatprep.subr.mxu0 0.0
      %550 = vmatpush2.msra.mxu0 0.0
      %551 = vmatprep.subr.mxu0 0.0
      %552 = vmatpush2.msra.mxu0 0.0
      %553 = vmatprep.subr.mxu0 0.0
      %554 = vmatpush2.msra.mxu0 0.0
      %555 = vmatprep.subr.mxu0 0.0
      %556 = vmatpush2.msra.mxu0 0.0
      %557 = vmatprep.subr.mxu0 0.0
      %558 = vmatpush2.msra.mxu0 0.0
      %559 = vmatprep.subr.mxu0 0.0
      %560 = vmatpush2.msra.mxu0 0.0
      %561 = vmatprep.subr.mxu0 0.0
      %562 = vmatpush2.msra.mxu0 0.0
      %563 = vmatprep.mubr.f32.mxu0 0.0
      %564 = vmatmul.mubr.f32.gmra.mxu0 %v474
      %v565 = vpop.f32.mrf.mxu0
      %v566 = vadd.f32 %v497, %v565
      %v567 = vpop.f32.mrf.mxu0
      %568 = vmatprep.mubr.f32.mxu0 0.0
      %569 = vmatmul.mubr.f32.gmra.mxu0 %v475
      %v570 = vpop.f32.mrf.mxu0
      %v571 = vadd.f32 %v497, %v570
      %v572 = vpop.f32.mrf.mxu0
      %573 = vdwg.mxu0
      %vm574 = vcmask 130048
      %575 = vst.msk [vmem:[%s280] sm:$0xff] %vm574, %v566
      %576 = vst.msk [vmem:[%s280 + $0x8] sm:$0xff] %vm574, %v571
      %s577 = smul.u32 2, %s18
      %p578 = scmp.lt.s32.totalorder %s577, 3
      %s579 = scalar_select %p578, %s577, 3
      %s580 = smul.addr %s579, 8
      %s581 = scalar_lea.vmem %s7, %s580
      // Predicated region
      $region49: #{tpu_custom_call.1} parent=47 // pred_check
        %p582 = pneg %p188
      $region50: #{tpu_custom_call.1} parent=47 // pred_check_branch
        %584 = sbr.rel (%p582) target = $region52
      $region51: #{tpu_custom_call.1} parent=47 // pred_region
        %s585 = smul.u32 2, %s18
      $region52: #{tpu_custom_call.1} parent=47 // pred_fallthru
        _
    $region48: #{tpu_custom_call.1} parent=5 // pred_fallthru
      _
    %p586 = scmp.le.s32.totalorder 2, %s13
    // Predicated region
    $region53: #{tpu_custom_call.1} parent=5 // pred_check
      %p587 = pneg %p586
    $region54: #{tpu_custom_call.1} parent=5 // pred_check_branch
      %589 = sbr.rel (%p587) target = $region56
    $region55: #{tpu_custom_call.1} parent=5 // pred_region
      %s590 = ssub.s32 %s13, 2
      // Predicated region
      $region57: #{tpu_custom_call.1} parent=55 // pred_check
        %p591 = pneg %p194
      $region58: #{tpu_custom_call.1} parent=55 // pred_check_branch
        %593 = sbr.rel (%p591) target = $region60
      $region59: #{tpu_custom_call.1} parent=55 // pred_region
        %s594 = smul.u32 2, %s19
        %p595 = scmp.lt.s32.totalorder %s594, 3
        %s596 = scalar_select %p595, %s594, 3
        %s597 = smul.addr %s596, 8
        %s598 = scalar_lea.vmem %s7, %s597
      $region60: #{tpu_custom_call.1} parent=55 // pred_fallthru
        _
    $region56: #{tpu_custom_call.1} parent=5 // pred_fallthru
      _
  $region6: #{tpu_custom_call.1} parent=0 // loop_footer
    %s17 = sadd.s32 1, %s13
  $region7: #{tpu_custom_call.1} parent=0 // loop_footer_branch
    %12 = sbr.rel target = $region3
  $region8: #{tpu_custom_call.1} parent=0 // loop_exit
    _

</llo_original>
